<compile_context>
chip_gen: v7x
topology: tpu7x:2x2x1
jax: 0.10.0
libtpu: 0.0.40
codegen_flags: <defaults>
</compile_context>

<pallas_src>
import functools

import jax
import jax.numpy as jnp
from jax.experimental import pallas as pl
from jax.experimental.pallas import tpu as pltpu


_VMEM_LIMIT_BYTES = 48 * 1024 * 1024     # safe on v5e/v6e (128 MiB) and v7x (64 MiB)
_X_BLOCK_BUDGET_BYTES = 4 * 1024 * 1024  # per-buffer budget for one x block


def _shared_mlp(p, w1t_ref, b1t_ref, w2t_ref, b2t_ref):
    """Shared MLP on a pooled column p of shape (C, 1) (channels on sublanes).

    Weights are pre-transposed in the wrapper: w1t (Cr, C), b1t (Cr, 1),
    w2t (C, Cr), b2t (C, 1), so the result stays channel-on-sublanes and the
    final per-channel scale needs no relayout.
    """
    h = jnp.dot(w1t_ref[...], p, preferred_element_type=jnp.float32)        # (Cr, 1)
    h = jnp.maximum(h + b1t_ref[...], 0.0)
    att = jnp.dot(w2t_ref[...], h, preferred_element_type=jnp.float32)      # (C, 1)
    return att + b2t_ref[...]


# --------------------------------------------------------------------------
# Path 1: fused single pass.  Block = (bt, C, HW); 1 read + 1 write of x.
# --------------------------------------------------------------------------
def _fused_kernel(x_ref, w1t_ref, b1t_ref, w2t_ref, b2t_ref, o_ref, *, hw_total):
    bt = x_ref.shape[0]
    x = x_ref[...]                                                 # (bt, C, HW) native dtype

    # Global pooling over lanes; f32-accumulated mean, native-dtype max.
    s = jnp.sum(x.astype(jnp.float32), axis=-1, keepdims=True)     # (bt, C, 1)
    avg = s * (1.0 / hw_total)
    mx = jnp.max(x, axis=-1, keepdims=True).astype(jnp.float32)    # (bt, C, 1)

    for b in range(bt):                                            # static unroll, bt small
        att = (_shared_mlp(avg[b], w1t_ref, b1t_ref, w2t_ref, b2t_ref)
               + _shared_mlp(mx[b], w1t_ref, b1t_ref, w2t_ref, b2t_ref))   # (C, 1)
        scale = jax.nn.sigmoid(att).astype(o_ref.dtype)            # (C, 1), cast once
        o_ref[b] = x[b] * scale                                    # lane-broadcast, native dtype


# --------------------------------------------------------------------------
# Path 2a: pooling + MLP over HW tiles -> scale[B, C, 1].
# --------------------------------------------------------------------------
def _pool_mlp_kernel(x_ref, w1t_ref, b1t_ref, w2t_ref, b2t_ref, scale_ref,
                     sum_acc, max_acc, *, hw_total):
    t = pl.program_id(1)

    @pl.when(t == 0)
    def _init():
        sum_acc[...] = jnp.zeros_like(sum_acc)
        max_acc[...] = jnp.full_like(max_acc, -jnp.inf)

    x = x_ref[0]                                                   # (C, hw_tile)
    sum_acc[...] += jnp.sum(x.astype(jnp.float32), axis=-1, keepdims=True)
    max_acc[...] = jnp.maximum(
        max_acc[...], jnp.max(x, axis=-1, keepdims=True).astype(jnp.float32))

    @pl.when(t == pl.num_programs(1) - 1)
    def _finish():
        avg = sum_acc[...] * (1.0 / hw_total)                      # true-HW mean
        att = (_shared_mlp(avg, w1t_ref, b1t_ref, w2t_ref, b2t_ref)
               + _shared_mlp(max_acc[...], w1t_ref, b1t_ref, w2t_ref, b2t_ref))
        scale_ref[0] = jax.nn.sigmoid(att).astype(scale_ref.dtype)  # (C, 1)


# --------------------------------------------------------------------------
# Path 2b: apply the per-channel scale, HW-tiled (lane-dense stores).
# --------------------------------------------------------------------------
def _scale_kernel(scale_ref, x_ref, o_ref):
    x = x_ref[0]                                                   # (C, hw_tile)
    o_ref[0] = x * scale_ref[0].astype(x.dtype)                    # (C, 1) lane-broadcast


def _pick_batch_block(batch, slab_bytes, budget):
    """Largest divisor of batch whose slab fits the budget; keep >=2 grid steps."""
    best = 1
    for d in range(1, batch + 1):
        if batch % d == 0 and d * slab_bytes <= budget and (batch // d >= 2 or batch == 1):
            best = d
    return best


def _pick_hw_tile(hw, c, itemsize, budget):
    """Largest multiple of 128 dividing hw whose (C, tile) block fits the budget."""
    best = 128
    for cand in range(128, hw + 1, 128):
        if hw % cand == 0 and c * cand * itemsize <= budget:
            best = cand
    return best


def channel_gate(x_nchw, w1, b1, w2, b2, *,
                 x_block_budget_bytes=_X_BLOCK_BUDGET_BYTES):
    """ChannelGate forward.  x_nchw: (B, C, H, W).
    w1: (C, Cr), b1: (1, Cr), w2: (Cr, C), b2: (1, C)  ((in, out) layout)."""
    B, C, H, W = x_nchw.shape
    HW = H * W
    Cr = w1.shape[1]
    itemsize = jnp.dtype(x_nchw.dtype).itemsize

    # Free, contiguous reshape of NCHW -- no transpose passes over HBM.
    x = x_nchw.reshape(B, C, HW)

    # Tiny parameter re-layouts (channel-on-sublanes orientation inside kernels).
    w1t = jnp.transpose(w1)            # (Cr, C)
    b1t = jnp.reshape(b1, (Cr, 1))     # (Cr, 1)
    w2t = jnp.transpose(w2)            # (C, Cr)
    b2t = jnp.reshape(b2, (C, 1))      # (C, 1)

    slab_bytes = C * HW * itemsize
    mlp_flops_per_batch = 2 * (2 * C * Cr + 2 * Cr * C)
    param_bytes = (w1.size + b1.size + w2.size + b2.size) * 4
    fits = slab_bytes <= x_block_budget_bytes

    if fits or HW % 128 != 0:
        # -------- fused single pass: 1 read + 1 write of x --------
        # TODO(synk): slabs larger than the budget with HW not a multiple of 128
        # fall through to this whole-slab path (relying on the raised
        # vmem_limit_bytes) instead of a padded HW-tiled path.
        bt = _pick_batch_block(B, slab_bytes, x_block_budget_bytes) if fits else 1
        out = pl.pallas_call(
            functools.partial(_fused_kernel, hw_total=HW),
            out_shape=jax.ShapeDtypeStruct((B, C, HW), x.dtype),
            grid_spec=pltpu.PrefetchScalarGridSpec(
                num_scalar_prefetch=0,
                grid=(B // bt,),
                in_specs=[
                    pl.BlockSpec((bt, C, HW), lambda b: (b, 0, 0)),
                    pl.BlockSpec((Cr, C), lambda b: (0, 0)),
                    pl.BlockSpec((Cr, 1), lambda b: (0, 0)),
                    pl.BlockSpec((C, Cr), lambda b: (0, 0)),
                    pl.BlockSpec((C, 1), lambda b: (0, 0)),
                ],
                out_specs=pl.BlockSpec((bt, C, HW), lambda b: (b, 0, 0)),
            ),
            compiler_params=pltpu.CompilerParams(
                dimension_semantics=("parallel",),
                vmem_limit_bytes=_VMEM_LIMIT_BYTES),
            cost_estimate=pl.CostEstimate(
                flops=B * (3 * C * HW + mlp_flops_per_batch),
                transcendentals=B * C,
                bytes_accessed=2 * B * C * HW * itemsize + param_bytes),
        )(x, w1t, b1t, w2t, b2t)
        return out.reshape(B, C, H, W)

    # -------- two-pass HW-tiled path: pool+MLP kernel, then scale kernel --------
    hw_tile = _pick_hw_tile(HW, C, itemsize, x_block_budget_bytes)
    n_t = HW // hw_tile

    scale = pl.pallas_call(
        functools.partial(_pool_mlp_kernel, hw_total=HW),
        out_shape=jax.ShapeDtypeStruct((B, C, 1), jnp.float32),
        grid_spec=pltpu.PrefetchScalarGridSpec(
            num_scalar_prefetch=0,
            grid=(B, n_t),
            in_specs=[
                pl.BlockSpec((1, C, hw_tile), lambda b, t: (b, 0, t)),
                pl.BlockSpec((Cr, C), lambda b, t: (0, 0)),
                pl.BlockSpec((Cr, 1), lambda b, t: (0, 0)),
                pl.BlockSpec((C, Cr), lambda b, t: (0, 0)),
                pl.BlockSpec((C, 1), lambda b, t: (0, 0)),
            ],
            out_specs=pl.BlockSpec((1, C, 1), lambda b, t: (b, 0, 0)),
            scratch_shapes=[pltpu.VMEM((C, 1), jnp.float32),
                            pltpu.VMEM((C, 1), jnp.float32)],
        ),
        compiler_params=pltpu.CompilerParams(
            dimension_semantics=("parallel", "arbitrary"),
            vmem_limit_bytes=_VMEM_LIMIT_BYTES),
        cost_estimate=pl.CostEstimate(
            flops=B * (2 * C * HW + mlp_flops_per_batch),
            transcendentals=B * C,
            bytes_accessed=B * C * HW * itemsize + param_bytes),
    )(x, w1t, b1t, w2t, b2t)

    out = pl.pallas_call(
        _scale_kernel,
        out_shape=jax.ShapeDtypeStruct((B, C, HW), x.dtype),
        grid_spec=pltpu.PrefetchScalarGridSpec(
            num_scalar_prefetch=0,
            grid=(B, n_t),
            in_specs=[
                pl.BlockSpec((1, C, 1), lambda b, t: (b, 0, 0)),
                pl.BlockSpec((1, C, hw_tile), lambda b, t: (b, 0, t)),
            ],
            out_specs=pl.BlockSpec((1, C, hw_tile), lambda b, t: (b, 0, t)),
        ),
        compiler_params=pltpu.CompilerParams(
            dimension_semantics=("parallel", "parallel"),
            vmem_limit_bytes=_VMEM_LIMIT_BYTES),
        cost_estimate=pl.CostEstimate(
            flops=B * C * HW,
            transcendentals=0,
            bytes_accessed=2 * B * C * HW * itemsize + B * C * 4),
    )(scale, x)
    return out.reshape(B, C, H, W)


def channel_gate_reference(x, w1, b1, w2, b2):
    avg = jnp.mean(x, axis=(2, 3))
    mx = jnp.max(x, axis=(2, 3))

    def mlp(p):
        return jnp.maximum(p @ w1 + b1, 0.0) @ w2 + b2

    att = mlp(avg) + mlp(mx)
    scale = jax.nn.sigmoid(att)[:, :, None, None]
    return x * scale


if __name__ == "__main__":
    # Small shapes consistent with the module: gate_channels=32, reduction=16.
    B, C, H, W = 2, 32, 16, 16
    reduction_ratio = 16
    Cr = C // reduction_ratio

    key = jax.random.PRNGKey(0)
    kx, k1, k2, k3, k4 = jax.random.split(key, 5)

    x = jax.random.normal(kx, (B, C, H, W), dtype=jnp.float32)
    w1 = jax.random.normal(k1, (C, Cr), dtype=jnp.float32) * (1.0 / jnp.sqrt(C))
    b1 = jax.random.normal(k2, (1, Cr), dtype=jnp.float32) * 0.01
    w2 = jax.random.normal(k3, (Cr, C), dtype=jnp.float32) * (1.0 / jnp.sqrt(Cr))
    b2 = jax.random.normal(k4, (1, C), dtype=jnp.float32) * 0.01

    ref = channel_gate_reference(x, w1, b1, w2, b2)

    # 1) Default fused single-pass path.
    out = jax.block_until_ready(channel_gate(x, w1, b1, w2, b2))
    assert out.shape == x.shape
    assert jnp.allclose(out, ref, atol=1e-5, rtol=1e-5), "fused path mismatch"

    # 2) HW-tiled two-pass path (forced with a tiny block budget).
    out_tiled = jax.block_until_ready(
        channel_gate(x, w1, b1, w2, b2, x_block_budget_bytes=16 * 1024))
    assert jnp.allclose(out_tiled, ref, atol=1e-5, rtol=1e-5), "tiled path mismatch"

    # 3) Multi-batch block (bt > 1) fused path.
    xb = jnp.concatenate([x, x * 0.5], axis=0)               # (4, C, H, W)
    refb = channel_gate_reference(xb, w1, b1, w2, b2)
    outb = jax.block_until_ready(channel_gate(xb, w1, b1, w2, b2))
    assert jnp.allclose(outb, refb, atol=1e-5, rtol=1e-5), "multi-batch mismatch"

    print("KERNEL_OK")
</pallas_src>

<mosaic_0001>
module attributes {stable_mosaic.version = 11 : i64} {
  func.func @_fused_kernel(%arg0: i32, %arg1: memref<1x32x256xf32, #tpu.memory_space<vmem>>, %arg2: memref<2x32xf32, #tpu.memory_space<vmem>>, %arg3: memref<2x1xf32, #tpu.memory_space<vmem>>, %arg4: memref<32x2xf32, #tpu.memory_space<vmem>>, %arg5: memref<32x1xf32, #tpu.memory_space<vmem>>, %arg6: memref<1x32x256xf32, #tpu.memory_space<vmem>>) attributes {dimension_semantics = [#tpu.dimension_semantics<parallel>], iteration_bounds = array<i64: 2>, scalar_prefetch = 0 : i64, scratch_operands = 0 : i64, tpu.core_type = #tpu.core_type<tc>, window_params = [{transform_indices = @transform_0, window_bounds = array<i64: 1, 32, 256>}, {pipeline_mode = #tpu.pipeline_mode<synchronous>, transform_indices = @transform_1, window_bounds = array<i64: 2, 32>}, {pipeline_mode = #tpu.pipeline_mode<synchronous>, transform_indices = @transform_2, window_bounds = array<i64: 2, 1>}, {pipeline_mode = #tpu.pipeline_mode<synchronous>, transform_indices = @transform_3, window_bounds = array<i64: 32, 2>}, {pipeline_mode = #tpu.pipeline_mode<synchronous>, transform_indices = @transform_4, window_bounds = array<i64: 32, 1>}, {transform_indices = @transform_5, window_bounds = array<i64: 1, 32, 256>}]} {
    %c0 = arith.constant 0 : index
    %c0_0 = arith.constant 0 : index
    %c0_1 = arith.constant 0 : index
    %0 = vector.load %arg1[%c0, %c0_0, %c0_1] : memref<1x32x256xf32, #tpu.memory_space<vmem>>, vector<1x32x256xf32>
    %cst = arith.constant dense<0.000000e+00> : vector<1x32xf32>
    %1 = vector.multi_reduction <add>, %0, %cst [2] : vector<1x32x256xf32> to vector<1x32xf32>
    %2 = vector.shape_cast %1 : vector<1x32xf32> to vector<1x32x1xf32>
    %cst_2 = arith.constant 3.906250e-03 : f32
    %3 = vector.broadcast %cst_2 : f32 to vector<1x32x1xf32>
    %4 = arith.mulf %2, %3 : vector<1x32x1xf32>
    %cst_3 = arith.constant dense<0xFF800000> : vector<1x32xf32>
    %5 = vector.multi_reduction <maximumf>, %0, %cst_3 [2] : vector<1x32x256xf32> to vector<1x32xf32>
    %6 = vector.shape_cast %5 : vector<1x32xf32> to vector<1x32x1xf32>
    %7 = vector.shape_cast %4 : vector<1x32x1xf32> to vector<32x1xf32>
    %c0_4 = arith.constant 0 : index
    %c0_5 = arith.constant 0 : index
    %8 = vector.load %arg2[%c0_4, %c0_5] : memref<2x32xf32, #tpu.memory_space<vmem>>, vector<2x32xf32>
    %cst_6 = arith.constant dense<0.000000e+00> : vector<2x1xf32>
    %9 = tpu.matmul %8, %7, %cst_6 {dimension_numbers = #tpu.dot_dimension_numbers<[1], [0], [0], [1], [0, 0, 1, 1], [], []>} : vector<2x32xf32>, vector<32x1xf32>, vector<2x1xf32> -> vector<2x1xf32>
    %c0_7 = arith.constant 0 : index
    %c0_8 = arith.constant 0 : index
    %10 = vector.load %arg3[%c0_7, %c0_8] : memref<2x1xf32, #tpu.memory_space<vmem>>, vector<2x1xf32>
    %11 = arith.addf %9, %10 : vector<2x1xf32>
    %cst_9 = arith.constant 0.000000e+00 : f32
    %12 = vector.broadcast %cst_9 : f32 to vector<2x1xf32>
    %13 = arith.maximumf %11, %12 : vector<2x1xf32>
    %c0_10 = arith.constant 0 : index
    %c0_11 = arith.constant 0 : index
    %14 = vector.load %arg4[%c0_10, %c0_11] : memref<32x2xf32, #tpu.memory_space<vmem>>, vector<32x2xf32>
    %cst_12 = arith.constant dense<0.000000e+00> : vector<32x1xf32>
    %15 = tpu.matmul %14, %13, %cst_12 {dimension_numbers = #tpu.dot_dimension_numbers<[1], [0], [0], [1], [0, 0, 1, 1], [], []>} : vector<32x2xf32>, vector<2x1xf32>, vector<32x1xf32> -> vector<32x1xf32>
    %c0_13 = arith.constant 0 : index
    %c0_14 = arith.constant 0 : index
    %16 = vector.load %arg5[%c0_13, %c0_14] : memref<32x1xf32, #tpu.memory_space<vmem>>, vector<32x1xf32>
    %17 = arith.addf %15, %16 : vector<32x1xf32>
    %18 = vector.shape_cast %6 : vector<1x32x1xf32> to vector<32x1xf32>
    %c0_15 = arith.constant 0 : index
    %c0_16 = arith.constant 0 : index
    %19 = vector.load %arg2[%c0_15, %c0_16] : memref<2x32xf32, #tpu.memory_space<vmem>>, vector<2x32xf32>
    %cst_17 = arith.constant dense<0.000000e+00> : vector<2x1xf32>
    %20 = tpu.matmul %19, %18, %cst_17 {dimension_numbers = #tpu.dot_dimension_numbers<[1], [0], [0], [1], [0, 0, 1, 1], [], []>} : vector<2x32xf32>, vector<32x1xf32>, vector<2x1xf32> -> vector<2x1xf32>
    %c0_18 = arith.constant 0 : index
    %c0_19 = arith.constant 0 : index
    %21 = vector.load %arg3[%c0_18, %c0_19] : memref<2x1xf32, #tpu.memory_space<vmem>>, vector<2x1xf32>
    %22 = arith.addf %20, %21 : vector<2x1xf32>
    %cst_20 = arith.constant 0.000000e+00 : f32
    %23 = vector.broadcast %cst_20 : f32 to vector<2x1xf32>
    %24 = arith.maximumf %22, %23 : vector<2x1xf32>
    %c0_21 = arith.constant 0 : index
    %c0_22 = arith.constant 0 : index
    %25 = vector.load %arg4[%c0_21, %c0_22] : memref<32x2xf32, #tpu.memory_space<vmem>>, vector<32x2xf32>
    %cst_23 = arith.constant dense<0.000000e+00> : vector<32x1xf32>
    %26 = tpu.matmul %25, %24, %cst_23 {dimension_numbers = #tpu.dot_dimension_numbers<[1], [0], [0], [1], [0, 0, 1, 1], [], []>} : vector<32x2xf32>, vector<2x1xf32>, vector<32x1xf32> -> vector<32x1xf32>
    %c0_24 = arith.constant 0 : index
    %c0_25 = arith.constant 0 : index
    %27 = vector.load %arg5[%c0_24, %c0_25] : memref<32x1xf32, #tpu.memory_space<vmem>>, vector<32x1xf32>
    %28 = arith.addf %26, %27 : vector<32x1xf32>
    %29 = arith.addf %17, %28 : vector<32x1xf32>
    %30 = arith.negf %29 : vector<32x1xf32>
    %31 = math.exp %30 : vector<32x1xf32>
    %cst_26 = arith.constant 1.000000e+00 : f32
    %32 = vector.broadcast %cst_26 : f32 to vector<32x1xf32>
    %33 = arith.addf %32, %31 : vector<32x1xf32>
    %34 = arith.divf %32, %33 : vector<32x1xf32>
    %35 = vector.shape_cast %0 : vector<1x32x256xf32> to vector<32x256xf32>
    %36 = vector.broadcast %34 : vector<32x1xf32> to vector<32x256xf32>
    %37 = arith.mulf %35, %36 : vector<32x256xf32>
    %c0_27 = arith.constant 0 : index
    %c0_28 = arith.constant 0 : index
    %c0_29 = arith.constant 0 : index
    %38 = vector.load %arg6[%c0_27, %c0_28, %c0_29] : memref<1x32x256xf32, #tpu.memory_space<vmem>>, vector<1x32x256xf32>
    %39 = vector.shape_cast %38 : vector<1x32x256xf32> to vector<32x256xf32>
    %40 = vector.shape_cast %37 : vector<32x256xf32> to vector<1x32x256xf32>
    tpu.vector_store %arg6[%c0_27, %c0_28, %c0_29], %40 {strides = array<i32>} : memref<1x32x256xf32, #tpu.memory_space<vmem>>, vector<1x32x256xf32>,
    return
  }
  func.func @transform_0(%arg0: i32) -> (i32, i32, i32) {
    %c0_i32 = arith.constant 0 : i32
    %c0_i32_0 = arith.constant 0 : i32
    %c0_i32_1 = arith.constant 0 : i32
    return %arg0, %c0_i32, %c0_i32_0 : i32, i32, i32
  }
  func.func @transform_1(%arg0: i32) -> (i32, i32) {
    %c0_i32 = arith.constant 0 : i32
    %c0_i32_0 = arith.constant 0 : i32
    %c0_i32_1 = arith.constant 0 : i32
    return %c0_i32, %c0_i32_0 : i32, i32
  }
  func.func @transform_2(%arg0: i32) -> (i32, i32) {
    %c0_i32 = arith.constant 0 : i32
    %c0_i32_0 = arith.constant 0 : i32
    %c0_i32_1 = arith.constant 0 : i32
    return %c0_i32, %c0_i32_0 : i32, i32
  }
  func.func @transform_3(%arg0: i32) -> (i32, i32) {
    %c0_i32 = arith.constant 0 : i32
    %c0_i32_0 = arith.constant 0 : i32
    %c0_i32_1 = arith.constant 0 : i32
    return %c0_i32, %c0_i32_0 : i32, i32
  }
  func.func @transform_4(%arg0: i32) -> (i32, i32) {
    %c0_i32 = arith.constant 0 : i32
    %c0_i32_0 = arith.constant 0 : i32
    %c0_i32_1 = arith.constant 0 : i32
    return %c0_i32, %c0_i32_0 : i32, i32
  }
  func.func @transform_5(%arg0: i32) -> (i32, i32, i32) {
    %c0_i32 = arith.constant 0 : i32
    %c0_i32_0 = arith.constant 0 : i32
    %c0_i32_1 = arith.constant 0 : i32
    return %arg0, %c0_i32, %c0_i32_0 : i32, i32, i32
  }
}

</mosaic_0001>

<llo_original>
// kernel: tpu_custom_call.1
$region0: #{tpu_custom_call.1}
  #allocation0 [shape = 'u32[]', space=smem, size = 0x4, offset = 0x4, fixed_abs, tag = 'smem constant byte address 0x4 - core index']
  #allocation1 [shape = 'u32[144,128]{1,0:T(1,128)}', space=vmem, size = 0x12000, scoped, tag = 'internal scratch']
  %s0 = inlined_call_operand.hbm [shape: f32[2,32,256], index: 0, kind: input, shape index: {}]
  %s1 = inlined_call_operand.vmem [shape: f32[2,32], index: 1, kind: input, shape index: {}]
  %s2 = inlined_call_operand.vmem [shape: f32[2,1], index: 2, kind: input, shape index: {}]
  %s3 = inlined_call_operand.vmem [shape: f32[32,2], index: 3, kind: input, shape index: {}]
  %s4 = inlined_call_operand.vmem [shape: f32[32,1], index: 4, kind: input, shape index: {}]
  %s5 = inlined_call_operand.hbm [shape: f32[2,32,256], index: 5, kind: output, shape index: {}]
  %s6 = sld [smem:[#allocation0]]
  $region57: #{tpu_custom_call.1} parent=0
    _
  %s8 = ssub.s32 1, %s6
  %s9 = scalar_select 0, %s8, %s6
  $region1: #{tpu_custom_call.1} parent=0
    #allocation2 [shape = 'u8[65536]{0}', space=vmem, size = 0x10000, scoped, tag = 'input window, operand 0']
    #allocation3 [shape = 's32[2]{0}', space=sflag, size = 0x8, scoped, tag = 'scoped memory for tpu_custom_call.1']
    #allocation4 [shape = 's32[2]{0}', space=sflag, size = 0x8, scoped, tag = 'scoped memory for tpu_custom_call.1']
    #allocation5 [shape = 'u8[65536]{0}', space=vmem, size = 0x10000, scoped, tag = 'output window, operand 0']
    %10 = vsyncpa [#allocation3], 0
    %s11 = scalar_lea.sflag [#allocation3], 1
    %12 = vsyncpa %s11, 0
    %13 = vsyncpa [#allocation4], 0
    %s14 = scalar_lea.sflag [#allocation4], 1
    %15 = vsyncpa %s14, 0
    loop: start=0, step=1, limit=4
    $region2: #{tpu_custom_call.1} parent=1 // loop_pre_header
      _
    $region3: #{tpu_custom_call.1} parent=1 // loop_header
      %s17 = sphi 0, %s21
      %p18 = scmp.ge.s32.totalorder %s17, 4
      %s27 = sphi 0, %s29
      %s30 = sphi 0, %s27
      %s31 = sphi 0, %s30
      %s47 = sphi 0, %s31
      %s51 = sphi 0, %s51
      %s53 = sphi 0, %s51
      %s54 = sphi 0, %s53
      %s68 = sphi 0, %s54
      %s72 = sphi 0, %s72
      %s74 = sphi 0, %s72
      %s75 = sphi 0, %s74
      %s89 = sphi 0, %s75
      %s93 = sphi 0, %s93
      %s95 = sphi 0, %s93
      %s96 = sphi 0, %s95
      %s110 = sphi 0, %s96
      %s114 = sphi 0, %s114
      %s116 = sphi 0, %s114
      %s117 = sphi 0, %s116
      %s131 = sphi 0, %s117
      %s137 = sphi 0, %s139
      %s140 = sphi 0, %s137
      %s141 = sphi 0, %s140
      %s157 = sphi 0, %s141
    $region4: #{tpu_custom_call.1} parent=1 // loop_header_branch
      %20 = sbr.rel (%p18) target = $region8
    $region5: #{tpu_custom_call.1} parent=1 // loop_body
      %s22 = ssub.s32 %s17, 1
      %s23 = ssub.s32 %s17, 2
      %s24 = sadd.s32 %s17, 1
      %s25 = ssub.s32 %s17, %s24
      %p26 = scmp.eq.s32.totalorder %s25, 0
      %s28 = sadd.s32 %s27, 1
      %s29 = scalar_select %p26, %s27, %s28
      %p32 = pneg %p26
      %p33 = scmp.eq.s32.totalorder %s17, 1
      %p34 = por %p32, %p33
      %p35 = scmp.ne.s32.totalorder %s27, %s30
      %p36 = scmp.eq.s32.totalorder %s17, 0
      %p37 = por %p35, %p36
      %p38 = scmp.ne.s32.totalorder %s27, %s30
      %p39 = scmp.eq.s32.totalorder %s22, 1
      %p40 = por %p38, %p39
      %p41 = scmp.ne.s32.totalorder %s30, %s31
      %p42 = scmp.eq.s32.totalorder %s22, 0
      %p43 = por %p41, %p42
      %p44 = scmp.ne.s32.totalorder %s30, %s31
      %p45 = scmp.eq.s32.totalorder %s23, 1
      %p46 = por %p44, %p45
      %p48 = scmp.ne.s32.totalorder %s31, %s47
      %p49 = scmp.eq.s32.totalorder %s23, 0
      %p50 = por %p48, %p49
      %s52 = sadd.s32 %s51, 1
      %p55 = scmp.eq.s32.totalorder %s17, 1
      %p56 = scmp.ne.s32.totalorder %s51, %s53
      %p57 = scmp.eq.s32.totalorder %s17, 0
      %p58 = por %p56, %p57
      %p59 = scmp.ne.s32.totalorder %s51, %s53
      %p60 = scmp.eq.s32.totalorder %s22, 1
      %p61 = por %p59, %p60
      %p62 = scmp.ne.s32.totalorder %s53, %s54
      %p63 = scmp.eq.s32.totalorder %s22, 0
      %p64 = por %p62, %p63
      %p65 = scmp.ne.s32.totalorder %s53, %s54
      %p66 = scmp.eq.s32.totalorder %s23, 1
      %p67 = por %p65, %p66
      %p69 = scmp.ne.s32.totalorder %s54, %s68
      %p70 = scmp.eq.s32.totalorder %s23, 0
      %p71 = por %p69, %p70
      %s73 = sadd.s32 %s72, 1
      %p76 = scmp.eq.s32.totalorder %s17, 1
      %p77 = scmp.ne.s32.totalorder %s72, %s74
      %p78 = scmp.eq.s32.totalorder %s17, 0
      %p79 = por %p77, %p78
      %p80 = scmp.ne.s32.totalorder %s72, %s74
      %p81 = scmp.eq.s32.totalorder %s22, 1
      %p82 = por %p80, %p81
      %p83 = scmp.ne.s32.totalorder %s74, %s75
      %p84 = scmp.eq.s32.totalorder %s22, 0
      %p85 = por %p83, %p84
      %p86 = scmp.ne.s32.totalorder %s74, %s75
      %p87 = scmp.eq.s32.totalorder %s23, 1
      %p88 = por %p86, %p87
      %p90 = scmp.ne.s32.totalorder %s75, %s89
      %p91 = scmp.eq.s32.totalorder %s23, 0
      %p92 = por %p90, %p91
      %s94 = sadd.s32 %s93, 1
      %p97 = scmp.eq.s32.totalorder %s17, 1
      %p98 = scmp.ne.s32.totalorder %s93, %s95
      %p99 = scmp.eq.s32.totalorder %s17, 0
      %p100 = por %p98, %p99
      %p101 = scmp.ne.s32.totalorder %s93, %s95
      %p102 = scmp.eq.s32.totalorder %s22, 1
      %p103 = por %p101, %p102
      %p104 = scmp.ne.s32.totalorder %s95, %s96
      %p105 = scmp.eq.s32.totalorder %s22, 0
      %p106 = por %p104, %p105
      %p107 = scmp.ne.s32.totalorder %s95, %s96
      %p108 = scmp.eq.s32.totalorder %s23, 1
      %p109 = por %p107, %p108
      %p111 = scmp.ne.s32.totalorder %s96, %s110
      %p112 = scmp.eq.s32.totalorder %s23, 0
      %p113 = por %p111, %p112
      %s115 = sadd.s32 %s114, 1
      %p118 = scmp.eq.s32.totalorder %s17, 1
      %p119 = scmp.ne.s32.totalorder %s114, %s116
      %p120 = scmp.eq.s32.totalorder %s17, 0
      %p121 = por %p119, %p120
      %p122 = scmp.ne.s32.totalorder %s114, %s116
      %p123 = scmp.eq.s32.totalorder %s22, 1
      %p124 = por %p122, %p123
      %p125 = scmp.ne.s32.totalorder %s116, %s117
      %p126 = scmp.eq.s32.totalorder %s22, 0
      %p127 = por %p125, %p126
      %p128 = scmp.ne.s32.totalorder %s116, %s117
      %p129 = scmp.eq.s32.totalorder %s23, 1
      %p130 = por %p128, %p129
      %p132 = scmp.ne.s32.totalorder %s117, %s131
      %p133 = scmp.eq.s32.totalorder %s23, 0
      %p134 = por %p132, %p133
      %s135 = ssub.s32 %s17, %s24
      %p136 = scmp.eq.s32.totalorder %s135, 0
      %s138 = sadd.s32 %s137, 1
      %s139 = scalar_select %p136, %s137, %s138
      %p142 = pneg %p136
      %p143 = scmp.eq.s32.totalorder %s17, 1
      %p144 = por %p142, %p143
      %p145 = scmp.ne.s32.totalorder %s137, %s140
      %p146 = scmp.eq.s32.totalorder %s17, 0
      %p147 = por %p145, %p146
      %p148 = scmp.ne.s32.totalorder %s137, %s140
      %p149 = scmp.eq.s32.totalorder %s22, 1
      %p150 = por %p148, %p149
      %p151 = scmp.ne.s32.totalorder %s140, %s141
      %p152 = scmp.eq.s32.totalorder %s22, 0
      %p153 = por %p151, %p152
      %p154 = scmp.ne.s32.totalorder %s140, %s141
      %p155 = scmp.eq.s32.totalorder %s23, 1
      %p156 = por %p154, %p155
      %p158 = scmp.ne.s32.totalorder %s141, %s157
      %p159 = scmp.eq.s32.totalorder %s23, 0
      %p160 = por %p158, %p159
      %p161 = scmp.le.s32.totalorder 1, %s17
      %p162 = scmp.lt.s32.totalorder %s17, 3
      %p163 = pnand %p161, %p162
      %p164 = pneg %p163
      // Predicated region
      $region9: #{tpu_custom_call.1} parent=5 // pred_check
        _
      $region10: #{tpu_custom_call.1} parent=5 // pred_check_branch
        %166 = sbr.rel (%p163) target = $region12
      $region11: #{tpu_custom_call.1} parent=5 // pred_region
        %s167 = ssub.s32 %s17, 1
        // Predicated region
        $region13: #{tpu_custom_call.1} parent=11 // pred_check
          %p168 = pneg %p64
        $region14: #{tpu_custom_call.1} parent=11 // pred_check_branch
          %170 = sbr.rel (%p168) target = $region16
        $region15: #{tpu_custom_call.1} parent=11 // pred_region
          _
        $region16: #{tpu_custom_call.1} parent=11 // pred_fallthru
          _
        // Predicated region
        $region17: #{tpu_custom_call.1} parent=11 // pred_check
          %p171 = pneg %p85
        $region18: #{tpu_custom_call.1} parent=11 // pred_check_branch
          %173 = sbr.rel (%p171) target = $region20
        $region19: #{tpu_custom_call.1} parent=11 // pred_region
          _
        $region20: #{tpu_custom_call.1} parent=11 // pred_fallthru
          _
        // Predicated region
        $region21: #{tpu_custom_call.1} parent=11 // pred_check
          %p174 = pneg %p106
        $region22: #{tpu_custom_call.1} parent=11 // pred_check_branch
          %176 = sbr.rel (%p174) target = $region24
        $region23: #{tpu_custom_call.1} parent=11 // pred_region
          _
        $region24: #{tpu_custom_call.1} parent=11 // pred_fallthru
          _
        // Predicated region
        $region25: #{tpu_custom_call.1} parent=11 // pred_check
          %p177 = pneg %p127
        $region26: #{tpu_custom_call.1} parent=11 // pred_check_branch
          %179 = sbr.rel (%p177) target = $region28
        $region27: #{tpu_custom_call.1} parent=11 // pred_region
          _
        $region28: #{tpu_custom_call.1} parent=11 // pred_fallthru
          _
      $region12: #{tpu_custom_call.1} parent=5 // pred_fallthru
        _
      %p180 = scmp.lt.s32.totalorder %s17, 2
      // Predicated region
      $region29: #{tpu_custom_call.1} parent=5 // pred_check
        %p181 = pneg %p180
      $region30: #{tpu_custom_call.1} parent=5 // pred_check_branch
        %183 = sbr.rel (%p181) target = $region32
      $region31: #{tpu_custom_call.1} parent=5 // pred_region
        // Predicated region
        $region33: #{tpu_custom_call.1} parent=31 // pred_check
          %p184 = pneg %p37
        $region34: #{tpu_custom_call.1} parent=31 // pred_check_branch
          %186 = sbr.rel (%p184) target = $region36
        $region35: #{tpu_custom_call.1} parent=31 // pred_region
          %s187 = sand.u32 %s27, 1
          %s188 = scalar_lea.sflag [#allocation3], %s187
          %s189 = sand.u32 %s27, 1
          %s190 = smul.addr %s189, 64
          %s191 = scalar_lea.vmem [#allocation2], %s190
          %s193 = ssub.s32 1024, 1024
          %194 = vsyncadd %s188, %s193
          %s195 = smul.addr %s17, 8
          %s196 = smul.addr %s195, 128
          %s197 = scalar_lea.hbm %s0, %s196
          %s198 = sshll.u32 %s191, 4
          %s199 = int_to_ptr.vmem [resolvable:$true] %s198
          %204 = dma.hbm_to_vmem [thread:$0]  %s197, 1024, %s199, %s188, 256, 256, 16
        $region36: #{tpu_custom_call.1} parent=31 // pred_fallthru
          _
      $region32: #{tpu_custom_call.1} parent=5 // pred_fallthru
        _
      %p205 = scmp.le.s32.totalorder 1, %s17
      %p206 = scmp.lt.s32.totalorder %s17, 3
      %p207 = pnand %p205, %p206
      %p208 = pneg %p207
      // Predicated region
      $region37: #{tpu_custom_call.1} parent=5 // pred_check
        _
      $region38: #{tpu_custom_call.1} parent=5 // pred_check_branch
        %210 = sbr.rel (%p207) target = $region40
      $region39: #{tpu_custom_call.1} parent=5 // pred_region
        %s211 = ssub.s32 %s17, 1
        %s212 = sand.u32 %s30, 1
        %s213 = scalar_lea.sflag [#allocation3], %s212
        %s214 = sand.u32 %s30, 1
        %s215 = smul.addr %s214, 64
        %s216 = scalar_lea.vmem [#allocation2], %s215
        // Predicated region
        $region41: #{tpu_custom_call.1} parent=39 // pred_check
          %p217 = pneg %p43
        $region42: #{tpu_custom_call.1} parent=39 // pred_check_branch
          %219 = sbr.rel (%p217) target = $region44
        $region43: #{tpu_custom_call.1} parent=39 // pred_region
          %220 = dma.done %s213, 1024
        $region44: #{tpu_custom_call.1} parent=39 // pred_fallthru
          _
        %s221 = sand.u32 %s30, 1
        %s222 = scalar_lea.sflag [#allocation3], %s221
        %s223 = sand.u32 %s30, 1
        %s224 = smul.addr %s223, 64
        %s225 = scalar_lea.vmem [#allocation2], %s224
        %p226 = pneg %p43
        %p227 = pneg %p40
        %p228 = pneg %p64
        %p229 = pneg %p61
        %p230 = pneg %p85
        %p231 = pneg %p82
        %p232 = pneg %p106
        %p233 = pneg %p103
        %p234 = pneg %p127
        %p235 = pneg %p124
        %p236 = pneg %p153
        %p237 = pneg %p150
        %s238 = sand.u32 %s140, 1
        %s239 = scalar_lea.sflag [#allocation4], %s238
        %s240 = sand.u32 %s140, 1
        %s241 = smul.addr %s240, 64
        %s242 = scalar_lea.vmem [#allocation5], %s241
        %v243 = vld [vmem:[%s216] sm:$0xff]
        %v244 = vld [vmem:[%s216 + $0x8] sm:$0xff]
        %v245 = vld [vmem:[%s216 + $0x10] sm:$0xff]
        %v246 = vld [vmem:[%s216 + $0x18] sm:$0xff]
        %v247 = vld [vmem:[%s216 + $0x20] sm:$0xff]
        %v248 = vld [vmem:[%s216 + $0x28] sm:$0xff]
        %v249 = vld [vmem:[%s216 + $0x30] sm:$0xff]
        %v250 = vld [vmem:[%s216 + $0x38] sm:$0xff]
        %v251 = vadd.f32 %v243, %v244
        %252 = vadd.xlane.f32.xlu0 %v251
        %v253 = vpop.xlane.xlu0 %252
        %v254 = vadd.f32 %v245, %v246
        %255 = vadd.xlane.f32.xlu0 %v254
        %v256 = vpop.xlane.xlu0 %255
        %v257 = vadd.f32 %v247, %v248
        %258 = vadd.xlane.f32.xlu0 %v257
        %v259 = vpop.xlane.xlu0 %258
        %v260 = vadd.f32 %v249, %v250
        %261 = vadd.xlane.f32.xlu0 %v260
        %v262 = vpop.xlane.xlu0 %261
        %v263 = vmul.f32 %v253, 0.00390625
        %v264 = vmul.f32 %v256, 0.00390625
        %v265 = vmul.f32 %v259, 0.00390625
        %v266 = vmul.f32 %v262, 0.00390625
        %v267 = vmax.f32 %v243, %v244
        %268 = vmax.xlane.f32.xlu0 %v267
        %v269 = vpop.xlane.xlu0 %268
        %v270 = vmax.f32 %v245, %v246
        %271 = vmax.xlane.f32.xlu0 %v270
        %v272 = vpop.xlane.xlu0 %271
        %v273 = vmax.f32 %v247, %v248
        %274 = vmax.xlane.f32.xlu0 %v273
        %v275 = vpop.xlane.xlu0 %274
        %v276 = vmax.f32 %v249, %v250
        %277 = vmax.xlane.f32.xlu0 %v276
        %v278 = vpop.xlane.xlu0 %277
        %v279 = vld [vmem:[%s1] sm:$0x3]
        %v280 = vld [vmem:[%s2] sm:$0x3]
        %vm281 = vcmask 261120
        %v283 = vsel %vm281, %v279, 0
        %285 = vmatprep.subr.mxu0 0.0
        %286 = vmatpush1.msra.mxu0 %v263
        %287 = vmatprep.subr.mxu0 0.0
        %288 = vmatpush1.msra.mxu0 %v264
        %289 = vmatprep.subr.mxu0 0.0
        %290 = vmatpush1.msra.mxu0 %v265
        %291 = vmatprep.subr.mxu0 0.0
        %292 = vmatpush1.msra.mxu0 %v266
        %293 = vmatprep.subr.mxu0 0.0
        %294 = vmatpush1.msra.mxu0 0.0
        %295 = vmatprep.subr.mxu0 0.0
        %296 = vmatpush1.msra.mxu0 0.0
        %297 = vmatprep.subr.mxu0 0.0
        %298 = vmatpush1.msra.mxu0 0.0
        %299 = vmatprep.subr.mxu0 0.0
        %300 = vmatpush1.msra.mxu0 0.0
        %301 = vmatprep.subr.mxu0 0.0
        %302 = vmatpush1.msra.mxu0 0.0
        %303 = vmatprep.subr.mxu0 0.0
        %304 = vmatpush1.msra.mxu0 0.0
        %305 = vmatprep.subr.mxu0 0.0
        %306 = vmatpush1.msra.mxu0 0.0
        %307 = vmatprep.subr.mxu0 0.0
        %308 = vmatpush1.msra.mxu0 0.0
        %309 = vmatprep.subr.mxu0 0.0
        %310 = vmatpush1.msra.mxu0 0.0
        %311 = vmatprep.subr.mxu0 0.0
        %312 = vmatpush1.msra.mxu0 0.0
        %313 = vmatprep.subr.mxu0 0.0
        %314 = vmatpush1.msra.mxu0 0.0
        %315 = vmatprep.subr.mxu0 0.0
        %316 = vmatpush1.msra.mxu0 0.0
        %317 = vmatprep.subr.mxu0 0.0
        %318 = vmatpush1.msra.mxu0 0.0
        %319 = vmatprep.subr.mxu0 0.0
        %320 = vmatpush1.msra.mxu0 0.0
        %321 = vmatprep.subr.mxu0 0.0
        %322 = vmatpush1.msra.mxu0 0.0
        %323 = vmatprep.subr.mxu0 0.0
        %324 = vmatpush1.msra.mxu0 0.0
        %325 = vmatprep.subr.mxu0 0.0
        %326 = vmatpush1.msra.mxu0 0.0
        %327 = vmatprep.subr.mxu0 0.0
        %328 = vmatpush1.msra.mxu0 0.0
        %329 = vmatprep.subr.mxu0 0.0
        %330 = vmatpush1.msra.mxu0 0.0
        %331 = vmatprep.subr.mxu0 0.0
        %332 = vmatpush1.msra.mxu0 0.0
        %333 = vmatprep.subr.mxu0 0.0
        %334 = vmatpush1.msra.mxu0 0.0
        %335 = vmatprep.subr.mxu0 0.0
        %336 = vmatpush1.msra.mxu0 0.0
        %337 = vmatprep.subr.mxu0 0.0
        %338 = vmatpush1.msra.mxu0 0.0
        %339 = vmatprep.subr.mxu0 0.0
        %340 = vmatpush1.msra.mxu0 0.0
        %341 = vmatprep.subr.mxu0 0.0
        %342 = vmatpush1.msra.mxu0 0.0
        %343 = vmatprep.subr.mxu0 0.0
        %344 = vmatpush1.msra.mxu0 0.0
        %345 = vmatprep.subr.mxu0 0.0
        %346 = vmatpush1.msra.mxu0 0.0
        %347 = vmatprep.subr.mxu0 0.0
        %348 = vmatpush1.msra.mxu0 0.0
        %349 = vmatprep.mubr.f32.mxu0 0.0
        %350 = vmatmul.mubr.f32.gmra.mrb[0].mxu0 %v283
        %v351 = vpop.f32.mrb[0].mxu0
        %v352 = vadd.f32 %v280, %v351
        %v353 = vpop.f32.mrb[0].mxu0
        %354 = vdwg.mxu0
        %v355 = vmax.f32 %v352, 0.0
        %v356 = vld [vmem:[%s3] sm:$0xff]
        %v357 = vld [vmem:[%s3 + $0x8] sm:$0xff]
        %v358 = vld [vmem:[%s3 + $0x10] sm:$0xff]
        %v359 = vld [vmem:[%s3 + $0x18] sm:$0xff]
        %v360 = vld [vmem:[%s4] sm:$0xff]
        %v361 = vld [vmem:[%s4 + $0x8] sm:$0xff]
        %v362 = vld [vmem:[%s4 + $0x10] sm:$0xff]
        %v363 = vld [vmem:[%s4 + $0x18] sm:$0xff]
        %vm364 = vcmask 15360
        %v366 = vsel %vm364, %v356, 0
        %v369 = vsel %vm364, %v357, 0
        %v372 = vsel %vm364, %v358, 0
        %v375 = vsel %vm364, %v359, 0
        %vm377 = vcmask 1041408
        %v379 = vsel %vm377, %v355, 0
        %381 = vmatprep.subr.mxu0 0.0
        %382 = vmatpush1.msra.mxu0 %v379
        %383 = vmatprep.subr.mxu0 0.0
        %384 = vmatpush1.msra.mxu0 0.0
        %385 = vmatprep.subr.mxu0 0.0
        %386 = vmatpush1.msra.mxu0 0.0
        %387 = vmatprep.subr.mxu0 0.0
        %388 = vmatpush1.msra.mxu0 0.0
        %389 = vmatprep.subr.mxu0 0.0
        %390 = vmatpush1.msra.mxu0 0.0
        %391 = vmatprep.subr.mxu0 0.0
        %392 = vmatpush1.msra.mxu0 0.0
        %393 = vmatprep.subr.mxu0 0.0
        %394 = vmatpush1.msra.mxu0 0.0
        %395 = vmatprep.subr.mxu0 0.0
        %396 = vmatpush1.msra.mxu0 0.0
        %397 = vmatprep.subr.mxu0 0.0
        %398 = vmatpush1.msra.mxu0 0.0
        %399 = vmatprep.subr.mxu0 0.0
        %400 = vmatpush1.msra.mxu0 0.0
        %401 = vmatprep.subr.mxu0 0.0
        %402 = vmatpush1.msra.mxu0 0.0
        %403 = vmatprep.subr.mxu0 0.0
        %404 = vmatpush1.msra.mxu0 0.0
        %405 = vmatprep.subr.mxu0 0.0
        %406 = vmatpush1.msra.mxu0 0.0
        %407 = vmatprep.subr.mxu0 0.0
        %408 = vmatpush1.msra.mxu0 0.0
        %409 = vmatprep.subr.mxu0 0.0
        %410 = vmatpush1.msra.mxu0 0.0
        %411 = vmatprep.subr.mxu0 0.0
        %412 = vmatpush1.msra.mxu0 0.0
        %413 = vmatprep.subr.mxu0 0.0
        %414 = vmatpush1.msra.mxu0 0.0
        %415 = vmatprep.subr.mxu0 0.0
        %416 = vmatpush1.msra.mxu0 0.0
        %417 = vmatprep.subr.mxu0 0.0
        %418 = vmatpush1.msra.mxu0 0.0
        %419 = vmatprep.subr.mxu0 0.0
        %420 = vmatpush1.msra.mxu0 0.0
        %421 = vmatprep.subr.mxu0 0.0
        %422 = vmatpush1.msra.mxu0 0.0
        %423 = vmatprep.subr.mxu0 0.0
        %424 = vmatpush1.msra.mxu0 0.0
        %425 = vmatprep.subr.mxu0 0.0
        %426 = vmatpush1.msra.mxu0 0.0
        %427 = vmatprep.subr.mxu0 0.0
        %428 = vmatpush1.msra.mxu0 0.0
        %429 = vmatprep.subr.mxu0 0.0
        %430 = vmatpush1.msra.mxu0 0.0
        %431 = vmatprep.subr.mxu0 0.0
        %432 = vmatpush1.msra.mxu0 0.0
        %433 = vmatprep.subr.mxu0 0.0
        %434 = vmatpush1.msra.mxu0 0.0
        %435 = vmatprep.subr.mxu0 0.0
        %436 = vmatpush1.msra.mxu0 0.0
        %437 = vmatprep.subr.mxu0 0.0
        %438 = vmatpush1.msra.mxu0 0.0
        %439 = vmatprep.subr.mxu0 0.0
        %440 = vmatpush1.msra.mxu0 0.0
        %441 = vmatprep.subr.mxu0 0.0
        %442 = vmatpush1.msra.mxu0 0.0
        %443 = vmatprep.subr.mxu0 0.0
        %444 = vmatpush1.msra.mxu0 0.0
        %445 = vmatprep.mubr.f32.mxu0 0.0
        %446 = vmatmul.mubr.f32.gmra.mrb[0].mxu0 %v366
        %v447 = vpop.f32.mrb[0].mxu0
        %v448 = vadd.f32 %v360, %v447
        %v449 = vpop.f32.mrb[0].mxu0
        %450 = vmatprep.mubr.f32.mxu0 0.0
        %451 = vmatmul.mubr.f32.gmra.mrb[0].mxu0 %v369
        %v452 = vpop.f32.mrb[0].mxu0
        %v453 = vadd.f32 %v361, %v452
        %v454 = vpop.f32.mrb[0].mxu0
        %455 = vmatprep.mubr.f32.mxu0 0.0
        %456 = vmatmul.mubr.f32.gmra.mrb[0].mxu0 %v372
        %v457 = vpop.f32.mrb[0].mxu0
        %v458 = vadd.f32 %v362, %v457
        %v459 = vpop.f32.mrb[0].mxu0
        %460 = vmatprep.mubr.f32.mxu0 0.0
        %461 = vmatmul.mubr.f32.gmra.mrb[0].mxu0 %v375
        %v462 = vpop.f32.mrb[0].mxu0
        %v463 = vadd.f32 %v363, %v462
        %v464 = vpop.f32.mrb[0].mxu0
        %465 = vdwg.mxu0
        %466 = vmatprep.subr.mxu0 0.0
        %467 = vmatpush1.msra.mxu0 %v269
        %468 = vmatprep.subr.mxu0 0.0
        %469 = vmatpush1.msra.mxu0 %v272
        %470 = vmatprep.subr.mxu0 0.0
        %471 = vmatpush1.msra.mxu0 %v275
        %472 = vmatprep.subr.mxu0 0.0
        %473 = vmatpush1.msra.mxu0 %v278
        %474 = vmatprep.subr.mxu0 0.0
        %475 = vmatpush1.msra.mxu0 0.0
        %476 = vmatprep.subr.mxu0 0.0
        %477 = vmatpush1.msra.mxu0 0.0
        %478 = vmatprep.subr.mxu0 0.0
        %479 = vmatpush1.msra.mxu0 0.0
        %480 = vmatprep.subr.mxu0 0.0
        %481 = vmatpush1.msra.mxu0 0.0
        %482 = vmatprep.subr.mxu0 0.0
        %483 = vmatpush1.msra.mxu0 0.0
        %484 = vmatprep.subr.mxu0 0.0
        %485 = vmatpush1.msra.mxu0 0.0
        %486 = vmatprep.subr.mxu0 0.0
        %487 = vmatpush1.msra.mxu0 0.0
        %488 = vmatprep.subr.mxu0 0.0
        %489 = vmatpush1.msra.mxu0 0.0
        %490 = vmatprep.subr.mxu0 0.0
        %491 = vmatpush1.msra.mxu0 0.0
        %492 = vmatprep.subr.mxu0 0.0
        %493 = vmatpush1.msra.mxu0 0.0
        %494 = vmatprep.subr.mxu0 0.0
        %495 = vmatpush1.msra.mxu0 0.0
        %496 = vmatprep.subr.mxu0 0.0
        %497 = vmatpush1.msra.mxu0 0.0
        %498 = vmatprep.subr.mxu0 0.0
        %499 = vmatpush1.msra.mxu0 0.0
        %500 = vmatprep.subr.mxu0 0.0
        %501 = vmatpush1.msra.mxu0 0.0
        %502 = vmatprep.subr.mxu0 0.0
        %503 = vmatpush1.msra.mxu0 0.0
        %504 = vmatprep.subr.mxu0 0.0
        %505 = vmatpush1.msra.mxu0 0.0
        %506 = vmatprep.subr.mxu0 0.0
        %507 = vmatpush1.msra.mxu0 0.0
        %508 = vmatprep.subr.mxu0 0.0
        %509 = vmatpush1.msra.mxu0 0.0
        %510 = vmatprep.subr.mxu0 0.0
        %511 = vmatpush1.msra.mxu0 0.0
        %512 = vmatprep.subr.mxu0 0.0
        %513 = vmatpush1.msra.mxu0 0.0
        %514 = vmatprep.subr.mxu0 0.0
        %515 = vmatpush1.msra.mxu0 0.0
        %516 = vmatprep.subr.mxu0 0.0
        %517 = vmatpush1.msra.mxu0 0.0
        %518 = vmatprep.subr.mxu0 0.0
        %519 = vmatpush1.msra.mxu0 0.0
        %520 = vmatprep.subr.mxu0 0.0
        %521 = vmatpush1.msra.mxu0 0.0
        %522 = vmatprep.subr.mxu0 0.0
        %523 = vmatpush1.msra.mxu0 0.0
        %524 = vmatprep.subr.mxu0 0.0
        %525 = vmatpush1.msra.mxu0 0.0
        %526 = vmatprep.subr.mxu0 0.0
        %527 = vmatpush1.msra.mxu0 0.0
        %528 = vmatprep.subr.mxu0 0.0
        %529 = vmatpush1.msra.mxu0 0.0
        %530 = vmatprep.mubr.f32.mxu0 0.0
        %531 = vmatmul.mubr.f32.gmra.mrb[0].mxu0 %v283
        %v532 = vpop.f32.mrb[0].mxu0
        %v533 = vadd.f32 %v280, %v532
        %v534 = vpop.f32.mrb[0].mxu0
        %535 = vdwg.mxu0
        %v536 = vmax.f32 %v533, 0.0
        %v538 = vsel %vm377, %v536, 0
        %540 = vmatprep.subr.mxu0 0.0
        %541 = vmatpush1.msra.mxu0 %v538
        %542 = vmatprep.subr.mxu0 0.0
        %543 = vmatpush1.msra.mxu0 0.0
        %544 = vmatprep.subr.mxu0 0.0
        %545 = vmatpush1.msra.mxu0 0.0
        %546 = vmatprep.subr.mxu0 0.0
        %547 = vmatpush1.msra.mxu0 0.0
        %548 = vmatprep.subr.mxu0 0.0
        %549 = vmatpush1.msra.mxu0 0.0
        %550 = vmatprep.subr.mxu0 0.0
        %551 = vmatpush1.msra.mxu0 0.0
        %552 = vmatprep.subr.mxu0 0.0
        %553 = vmatpush1.msra.mxu0 0.0
        %554 = vmatprep.subr.mxu0 0.0
        %555 = vmatpush1.msra.mxu0 0.0
        %556 = vmatprep.subr.mxu0 0.0
        %557 = vmatpush1.msra.mxu0 0.0
        %558 = vmatprep.subr.mxu0 0.0
        %559 = vmatpush1.msra.mxu0 0.0
        %560 = vmatprep.subr.mxu0 0.0
        %561 = vmatpush1.msra.mxu0 0.0
        %562 = vmatprep.subr.mxu0 0.0
        %563 = vmatpush1.msra.mxu0 0.0
        %564 = vmatprep.subr.mxu0 0.0
        %565 = vmatpush1.msra.mxu0 0.0
        %566 = vmatprep.subr.mxu0 0.0
        %567 = vmatpush1.msra.mxu0 0.0
        %568 = vmatprep.subr.mxu0 0.0
        %569 = vmatpush1.msra.mxu0 0.0
        %570 = vmatprep.subr.mxu0 0.0
        %571 = vmatpush1.msra.mxu0 0.0
        %572 = vmatprep.subr.mxu0 0.0
        %573 = vmatpush1.msra.mxu0 0.0
        %574 = vmatprep.subr.mxu0 0.0
        %575 = vmatpush1.msra.mxu0 0.0
        %576 = vmatprep.subr.mxu0 0.0
        %577 = vmatpush1.msra.mxu0 0.0
        %578 = vmatprep.subr.mxu0 0.0
        %579 = vmatpush1.msra.mxu0 0.0
        %580 = vmatprep.subr.mxu0 0.0
        %581 = vmatpush1.msra.mxu0 0.0
        %582 = vmatprep.subr.mxu0 0.0
        %583 = vmatpush1.msra.mxu0 0.0
        %584 = vmatprep.subr.mxu0 0.0
        %585 = vmatpush1.msra.mxu0 0.0
        %586 = vmatprep.subr.mxu0 0.0
        %587 = vmatpush1.msra.mxu0 0.0
        %588 = vmatprep.subr.mxu0 0.0
        %589 = vmatpush1.msra.mxu0 0.0
        %590 = vmatprep.subr.mxu0 0.0
        %591 = vmatpush1.msra.mxu0 0.0
        %592 = vmatprep.subr.mxu0 0.0
        %593 = vmatpush1.msra.mxu0 0.0
        %594 = vmatprep.subr.mxu0 0.0
        %595 = vmatpush1.msra.mxu0 0.0
        %596 = vmatprep.subr.mxu0 0.0
        %597 = vmatpush1.msra.mxu0 0.0
        %598 = vmatprep.subr.mxu0 0.0
        %599 = vmatpush1.msra.mxu0 0.0
        %600 = vmatprep.subr.mxu0 0.0
        %601 = vmatpush1.msra.mxu0 0.0
        %602 = vmatprep.subr.mxu0 0.0
        %603 = vmatpush1.msra.mxu0 0.0
        %604 = vmatprep.mubr.f32.mxu0 0.0
        %605 = vmatmul.mubr.f32.gmra.mrb[0].mxu0 %v366
        %v606 = vpop.f32.mrb[0].mxu0
        %v607 = vadd.f32 %v360, %v606
        %v608 = vpop.f32.mrb[0].mxu0
        %609 = vmatprep.mubr.f32.mxu0 0.0
        %610 = vmatmul.mubr.f32.gmra.mrb[0].mxu0 %v369
        %v611 = vpop.f32.mrb[0].mxu0
        %v612 = vadd.f32 %v361, %v611
        %v613 = vpop.f32.mrb[0].mxu0
        %614 = vmatprep.mubr.f32.mxu0 0.0
        %615 = vmatmul.mubr.f32.gmra.mrb[0].mxu0 %v372
        %v616 = vpop.f32.mrb[0].mxu0
        %v617 = vadd.f32 %v362, %v616
        %v618 = vpop.f32.mrb[0].mxu0
        %619 = vmatprep.mubr.f32.mxu0 0.0
        %620 = vmatmul.mubr.f32.gmra.mrb[0].mxu0 %v375
        %v621 = vpop.f32.mrb[0].mxu0
        %v622 = vadd.f32 %v363, %v621
        %v623 = vpop.f32.mrb[0].mxu0
        %624 = vdwg.mxu0
        %v625 = vadd.f32 %v448, %v607
        %v626 = vadd.f32 %v453, %v612
        %v627 = vadd.f32 %v458, %v617
        %v628 = vadd.f32 %v463, %v622
        %v629 = vxor.u32 %v625, 2147483648
        %v630 = vxor.u32 %v626, 2147483648
        %v631 = vxor.u32 %v627, 2147483648
        %v632 = vxor.u32 %v628, 2147483648
        %v633 = vmul.f32 %v629, 1.442695
        %v634 = vpow.pop %v633
        %v635 = vmul.f32 %v630, 1.442695
        %v636 = vpow.pop %v635
        %v637 = vmul.f32 %v631, 1.442695
        %v638 = vpow.pop %v637
        %v639 = vmul.f32 %v632, 1.442695
        %v640 = vpow.pop %v639
        %v641 = vadd.f32 %v634, 1.0
        %v642 = vadd.f32 %v636, 1.0
        %v643 = vadd.f32 %v638, 1.0
        %v644 = vadd.f32 %v640, 1.0
        %v645 = vrcp.pop %v641
        %v646 = vmul.f32 1.0, %v645
        %v647 = vrcp.pop %v642
        %v648 = vmul.f32 1.0, %v647
        %v649 = vrcp.pop %v643
        %v650 = vmul.f32 1.0, %v649
        %v651 = vrcp.pop %v644
        %v652 = vmul.f32 1.0, %v651
        %654 = vset.pattern.permute.xlu0 0
        %655 = vperm.xlu0 %654, %v646
        %v656 = vpop.permute.xlu0 %655
        %659 = vset.pattern.permute.xlu0 0
        %660 = vperm.xlu0 %659, %v648
        %v661 = vpop.permute.xlu0 %660
        %664 = vset.pattern.permute.xlu0 0
        %665 = vperm.xlu0 %664, %v650
        %v666 = vpop.permute.xlu0 %665
        %669 = vset.pattern.permute.xlu0 0
        %670 = vperm.xlu0 %669, %v652
        %v671 = vpop.permute.xlu0 %670
        %v673 = vmul.f32 %v243, %v656
        %v674 = vmul.f32 %v244, %v656
        %v675 = vmul.f32 %v245, %v661
        %v676 = vmul.f32 %v246, %v661
        %v677 = vmul.f32 %v247, %v666
        %v678 = vmul.f32 %v248, %v666
        %v679 = vmul.f32 %v249, %v671
        %v680 = vmul.f32 %v250, %v671
        %681 = vst [vmem:[%s242] sm:$0xff] %v673
        %682 = vst [vmem:[%s242 + $0x8] sm:$0xff] %v674
        %683 = vst [vmem:[%s242 + $0x10] sm:$0xff] %v675
        %684 = vst [vmem:[%s242 + $0x18] sm:$0xff] %v676
        %685 = vst [vmem:[%s242 + $0x20] sm:$0xff] %v677
        %686 = vst [vmem:[%s242 + $0x28] sm:$0xff] %v678
        %687 = vst [vmem:[%s242 + $0x30] sm:$0xff] %v679
        %688 = vst [vmem:[%s242 + $0x38] sm:$0xff] %v680
        %s689 = sand.u32 %s140, 1
        %s690 = scalar_lea.sflag [#allocation4], %s689
        %s691 = sand.u32 %s140, 1
        %s692 = smul.addr %s691, 64
        %s693 = scalar_lea.vmem [#allocation5], %s692
        // Predicated region
        $region45: #{tpu_custom_call.1} parent=39 // pred_check
          %p694 = pneg %p150
        $region46: #{tpu_custom_call.1} parent=39 // pred_check_branch
          %696 = sbr.rel (%p694) target = $region48
        $region47: #{tpu_custom_call.1} parent=39 // pred_region
          %s698 = ssub.s32 1024, 1024
          %699 = vsyncadd %s690, %s698
          %s700 = smul.addr %s22, 8
          %s701 = smul.addr %s700, 128
          %s702 = scalar_lea.hbm %s5, %s701
          %s703 = sshll.u32 %s693, 4
          %s704 = int_to_ptr.vmem [resolvable:$true] %s703
          %709 = dma.vmem_to_hbm [thread:$0]  %s704, 1024, %s702, %s690, 256, 256, 16
        $region48: #{tpu_custom_call.1} parent=39 // pred_fallthru
          _
      $region40: #{tpu_custom_call.1} parent=5 // pred_fallthru
        _
      %p710 = scmp.le.s32.totalorder 2, %s17
      // Predicated region
      $region49: #{tpu_custom_call.1} parent=5 // pred_check
        %p711 = pneg %p710
      $region50: #{tpu_custom_call.1} parent=5 // pred_check_branch
        %713 = sbr.rel (%p711) target = $region52
      $region51: #{tpu_custom_call.1} parent=5 // pred_region
        %s714 = ssub.s32 %s17, 2
        // Predicated region
        $region53: #{tpu_custom_call.1} parent=51 // pred_check
          %p715 = pneg %p156
        $region54: #{tpu_custom_call.1} parent=51 // pred_check_branch
          %717 = sbr.rel (%p715) target = $region56
        $region55: #{tpu_custom_call.1} parent=51 // pred_region
          %s718 = sand.u32 %s141, 1
          %s719 = scalar_lea.sflag [#allocation4], %s718
          %s720 = sand.u32 %s141, 1
          %s721 = smul.addr %s720, 64
          %s722 = scalar_lea.vmem [#allocation5], %s721
          %723 = dma.done %s719, 1024
        $region56: #{tpu_custom_call.1} parent=51 // pred_fallthru
          _
      $region52: #{tpu_custom_call.1} parent=5 // pred_fallthru
        _
    $region6: #{tpu_custom_call.1} parent=1 // loop_footer
      %s21 = sadd.s32 1, %s17
    $region7: #{tpu_custom_call.1} parent=1 // loop_footer_branch
      %16 = sbr.rel target = $region3
    $region8: #{tpu_custom_call.1} parent=1 // loop_exit
      _
    %724 = vsyncpa [#allocation3], 1
    %s725 = scalar_lea.sflag [#allocation3], 1
    %726 = vsyncpa %s725, 1
    %727 = vsyncpa [#allocation4], 1
    %s728 = scalar_lea.sflag [#allocation4], 1
    %729 = vsyncpa %s728, 1

</llo_original>
